<compile_context>
chip_gen: v5e
topology: v5e:2x2
jax: 0.10.0
libtpu: 0.0.40
codegen_flags: <defaults>
</compile_context>

<pallas_src>
import functools

import jax
import jax.numpy as jnp
from jax.experimental import pallas as pl
from jax.experimental.pallas import tpu as pltpu


def _round_up(x, m):
    return (x + m - 1) // m * m


def _conv_gn_lrelu_kernel(patches_ref, w_ref, bias_ref, gamma_ref, beta_ref,
                          pool_ref, gmat_ref, out_ref, *,
                          inv_count, eps, slope):
    """Fused Conv(im2col matmul) + GroupNorm + LeakyReLU for one batch-block.

    patches_ref: (Mb, Kp)  bf16  im2col patches (batch folded into rows)
    w_ref      : (Kp, Cp)  bf16  conv weights, rows = (dy,dx,cin), zero-padded
    bias/gamma/beta_ref: (1, Cp) f32, zero-padded past the real Cout channels
    pool_ref   : (Mb, Mb)  f32   1 where two rows belong to the same sample
    gmat_ref   : (Cp, Cp)  f32   1 where two real channels share a GN group
    out_ref    : (Mb, Cp)  f32
    """
    # One big MXU matmul (bf16 in, f32 accumulate) covering all K*K taps,
    # all input channels, and every sample of this batch-block.
    y = jnp.dot(patches_ref[...], w_ref[...],
                preferred_element_type=jnp.float32)
    y = y + bias_ref[...]

    # GroupNorm statistics as two lane-dense matmuls: `pool` sums rows of the
    # same sample, `gmat` sums channels of the same group -- no reshapes, no
    # sublane relayouts; zero-padded channels stay exactly zero.
    pool = pool_ref[...]
    gmat = gmat_ref[...]
    mean = jnp.dot(jnp.dot(pool, y, preferred_element_type=jnp.float32),
                   gmat, preferred_element_type=jnp.float32) * inv_count
    yc = y - mean
    var = jnp.dot(jnp.dot(pool, yc * yc, preferred_element_type=jnp.float32),
                  gmat, preferred_element_type=jnp.float32) * inv_count

    z = yc * jax.lax.rsqrt(var + eps) * gamma_ref[...] + beta_ref[...]
    # LeakyReLU(slope) on the full 128-lane-wide slab; lane-dense store.
    out_ref[...] = jnp.maximum(z, slope * z).astype(out_ref.dtype)


def conv_block(x_nhwc, w_hwio, bias, gamma, beta, *, stride, num_groups,
               eps=1e-5, slope=0.2, matmul_dtype=jnp.bfloat16):
    """One Conv2d(k=3, pad=1) + GroupNorm + LeakyReLU block via Pallas."""
    N, H, W, Cin = x_nhwc.shape
    K, _, _, Cout = w_hwio.shape
    pad = K // 2
    OH = (H + 2 * pad - K) // stride + 1
    OW = (W + 2 * pad - K) // stride + 1
    P = OH * OW

    # ---- im2col (layout plumbing; one strided slice per tap, wrapper-side) --
    xp = jnp.pad(x_nhwc, ((0, 0), (pad, pad), (pad, pad), (0, 0)))
    cols = []
    for dy in range(K):
        for dx in range(K):
            cols.append(jax.lax.slice(
                xp,
                (0, dy, dx, 0),
                (N, dy + stride * (OH - 1) + 1, dx + stride * (OW - 1) + 1, Cin),
                (1, stride, stride, 1)))
    patches = jnp.concatenate(cols, axis=-1).reshape(N * P, K * K * Cin)

    # ---- pad contraction & channel dims to lane-friendly multiples of 128 ---
    Kdim = K * K * Cin
    Kp = _round_up(Kdim, 128)
    Cp = _round_up(Cout, 128)
    patches = jnp.pad(patches, ((0, 0), (0, Kp - Kdim))).astype(matmul_dtype)
    w2 = jnp.pad(w_hwio.reshape(Kdim, Cout),
                 ((0, Kp - Kdim), (0, Cp - Cout))).astype(matmul_dtype)
    bias_p = jnp.pad(bias, (0, Cp - Cout)).reshape(1, Cp).astype(jnp.float32)
    gamma_p = jnp.pad(gamma, (0, Cp - Cout)).reshape(1, Cp).astype(jnp.float32)
    beta_p = jnp.pad(beta, (0, Cp - Cout)).reshape(1, Cp).astype(jnp.float32)

    # ---- GroupNorm pooling matrices (group channels / same-sample rows) -----
    gs = Cout // num_groups
    ch = jnp.arange(Cp)
    valid = ch < Cout
    gmat = (((ch[:, None] // gs) == (ch[None, :] // gs))
            & valid[:, None] & valid[None, :]).astype(jnp.float32)

    # Fold as many samples as sensible into the matmul M dim; keep a
    # ("parallel") batch-block grid axis so larger batches shard across the
    # two v7x TensorCores.
    spb = 1 if P >= 128 else min(N, max(1, 128 // P))
    while N % spb:
        spb -= 1
    m_block = spb * P
    n_blocks = N // spb
    rows = jnp.arange(m_block)
    pool = ((rows[:, None] // P) == (rows[None, :] // P)).astype(jnp.float32)

    kern = functools.partial(_conv_gn_lrelu_kernel,
                             inv_count=1.0 / float(P * gs),
                             eps=float(eps), slope=float(slope))

    out = pl.pallas_call(
        kern,
        out_shape=jax.ShapeDtypeStruct((N * P, Cp), jnp.float32),
        grid=(n_blocks,),
        in_specs=[
            pl.BlockSpec((m_block, Kp), lambda b: (b, 0)),
            pl.BlockSpec((Kp, Cp), lambda b: (0, 0)),
            pl.BlockSpec((1, Cp), lambda b: (0, 0)),
            pl.BlockSpec((1, Cp), lambda b: (0, 0)),
            pl.BlockSpec((1, Cp), lambda b: (0, 0)),
            pl.BlockSpec((m_block, m_block), lambda b: (0, 0)),
            pl.BlockSpec((Cp, Cp), lambda b: (0, 0)),
        ],
        out_specs=pl.BlockSpec((m_block, Cp), lambda b: (b, 0)),
        compiler_params=pltpu.CompilerParams(
            dimension_semantics=("parallel",)),
    )(patches, w2, bias_p, gamma_p, beta_p, pool, gmat)

    # Strip the zero-padded channels and restore the NHWC feature map.
    return out[:, :Cout].reshape(N, OH, OW, Cout)


def dcgan64_encoder(x_nchw, params, *, num_groups=16,
                    matmul_dtype=jnp.bfloat16):
    """Pallas forward: matches DCGAN64Encoder.forward (NCHW in / NCHW out)."""
    x = jnp.transpose(x_nchw, (0, 2, 3, 1))        # NHWC
    for p in params:
        x = conv_block(x, p["w"], p["b"], p["gamma"], p["beta"],
                       stride=p["stride"], num_groups=num_groups,
                       matmul_dtype=matmul_dtype)
    return jnp.transpose(x, (0, 3, 1, 2))          # NCHW


def dcgan64_encoder_ref(x_nchw, params, *, num_groups=16, eps=1e-5, slope=0.2):
    """Pure-JAX f32 reference mirroring the PyTorch module (for verification)."""
    x = jnp.transpose(x_nchw, (0, 2, 3, 1))
    for p in params:
        s = p["stride"]
        y = jax.lax.conv_general_dilated(
            x, p["w"], (s, s), ((1, 1), (1, 1)),
            dimension_numbers=("NHWC", "HWIO", "NHWC")) + p["b"]
        N, Hh, Ww, C = y.shape
        gs = C // num_groups
        yg = y.reshape(N, Hh, Ww, num_groups, gs)
        mean = yg.mean(axis=(1, 2, 4), keepdims=True)
        var = ((yg - mean) ** 2).mean(axis=(1, 2, 4), keepdims=True)
        yn = ((yg - mean) * jax.lax.rsqrt(var + eps)).reshape(N, Hh, Ww, C)
        z = yn * p["gamma"] + p["beta"]
        x = jnp.maximum(z, slope * z)
    return jnp.transpose(x, (0, 3, 1, 2))


if __name__ == "__main__":
    # Small shapes implied by the module: DCGAN64Encoder(in_c=4, out_c=32),
    # batch=2, spatial 16x16.  h_c = out_c // 2 = 16.
    batch, in_c, out_c = 2, 4, 32
    H = W = 16
    h_c = out_c // 2

    key = jax.random.PRNGKey(0)
    keys = jax.random.split(key, 16)
    x = jax.random.normal(keys[0], (batch, in_c, H, W), dtype=jnp.float32)

    layer_defs = [(in_c, h_c, 2), (h_c, h_c, 1), (h_c, out_c, 2)]
    params = []
    ki = 1
    for cin, cout, stride in layer_defs:
        w = 0.1 * jax.random.normal(keys[ki], (3, 3, cin, cout), jnp.float32); ki += 1
        b = 0.05 * jax.random.normal(keys[ki], (cout,), jnp.float32); ki += 1
        g = 1.0 + 0.1 * jax.random.normal(keys[ki], (cout,), jnp.float32); ki += 1
        bt = 0.1 * jax.random.normal(keys[ki], (cout,), jnp.float32); ki += 1
        params.append(dict(w=w, b=b, gamma=g, beta=bt, stride=stride))

    out = dcgan64_encoder(x, params)
    jax.block_until_ready(out)
    assert out.shape == (batch, out_c, 4, 4), out.shape

    ref = dcgan64_encoder_ref(x, params)
    # bf16 MXU inputs (with f32 accumulation) vs the f32 reference: allow a
    # few-percent deviation; post-GroupNorm values are O(1).
    assert jnp.allclose(out, ref, atol=5e-2, rtol=5e-2), \
        float(jnp.max(jnp.abs(out - ref)))

    print("KERNEL_OK")
</pallas_src>

<mosaic_0001>
module attributes {stable_mosaic.version = 11 : i64} {
  func.func @_conv_gn_lrelu_kernel(%arg0: i32, %arg1: memref<128x128xbf16, #tpu.memory_space<vmem>>, %arg2: memref<128x128xbf16, #tpu.memory_space<vmem>>, %arg3: memref<1x128xf32, #tpu.memory_space<vmem>>, %arg4: memref<1x128xf32, #tpu.memory_space<vmem>>, %arg5: memref<1x128xf32, #tpu.memory_space<vmem>>, %arg6: memref<128x128xf32, #tpu.memory_space<vmem>>, %arg7: memref<128x128xf32, #tpu.memory_space<vmem>>, %arg8: memref<128x128xf32, #tpu.memory_space<vmem>>) attributes {dimension_semantics = [#tpu.dimension_semantics<parallel>], iteration_bounds = array<i64: 1>, scalar_prefetch = 0 : i64, scratch_operands = 0 : i64, tpu.core_type = #tpu.core_type<tc>, window_params = [{transform_indices = @transform_0, window_bounds = array<i64: 128, 128>}, {pipeline_mode = #tpu.pipeline_mode<synchronous>, transform_indices = @transform_1, window_bounds = array<i64: 128, 128>}, {pipeline_mode = #tpu.pipeline_mode<synchronous>, transform_indices = @transform_2, window_bounds = array<i64: 1, 128>}, {pipeline_mode = #tpu.pipeline_mode<synchronous>, transform_indices = @transform_3, window_bounds = array<i64: 1, 128>}, {pipeline_mode = #tpu.pipeline_mode<synchronous>, transform_indices = @transform_4, window_bounds = array<i64: 1, 128>}, {pipeline_mode = #tpu.pipeline_mode<synchronous>, transform_indices = @transform_5, window_bounds = array<i64: 128, 128>}, {pipeline_mode = #tpu.pipeline_mode<synchronous>, transform_indices = @transform_6, window_bounds = array<i64: 128, 128>}, {transform_indices = @transform_7, window_bounds = array<i64: 128, 128>}]} {
    %c0 = arith.constant 0 : index
    %c0_0 = arith.constant 0 : index
    %0 = vector.load %arg1[%c0, %c0_0] : memref<128x128xbf16, #tpu.memory_space<vmem>>, vector<128x128xbf16>
    %c0_1 = arith.constant 0 : index
    %c0_2 = arith.constant 0 : index
    %1 = vector.load %arg2[%c0_1, %c0_2] : memref<128x128xbf16, #tpu.memory_space<vmem>>, vector<128x128xbf16>
    %cst = arith.constant dense<0.000000e+00> : vector<128x128xf32>
    %2 = tpu.matmul %0, %1, %cst {dimension_numbers = #tpu.dot_dimension_numbers<[1], [0], [0], [1], [0, 0, 1, 1], [], []>} : vector<128x128xbf16>, vector<128x128xbf16>, vector<128x128xf32> -> vector<128x128xf32>
    %c0_3 = arith.constant 0 : index
    %c0_4 = arith.constant 0 : index
    %3 = vector.load %arg3[%c0_3, %c0_4] : memref<1x128xf32, #tpu.memory_space<vmem>>, vector<1x128xf32>
    %4 = vector.broadcast %3 : vector<1x128xf32> to vector<128x128xf32>
    %5 = arith.addf %2, %4 : vector<128x128xf32>
    %c0_5 = arith.constant 0 : index
    %c0_6 = arith.constant 0 : index
    %6 = vector.load %arg6[%c0_5, %c0_6] : memref<128x128xf32, #tpu.memory_space<vmem>>, vector<128x128xf32>
    %c0_7 = arith.constant 0 : index
    %c0_8 = arith.constant 0 : index
    %7 = vector.load %arg7[%c0_7, %c0_8] : memref<128x128xf32, #tpu.memory_space<vmem>>, vector<128x128xf32>
    %cst_9 = arith.constant dense<0.000000e+00> : vector<128x128xf32>
    %8 = tpu.matmul %6, %5, %cst_9 {dimension_numbers = #tpu.dot_dimension_numbers<[1], [0], [0], [1], [0, 0, 1, 1], [], []>} : vector<128x128xf32>, vector<128x128xf32>, vector<128x128xf32> -> vector<128x128xf32>
    %cst_10 = arith.constant dense<0.000000e+00> : vector<128x128xf32>
    %9 = tpu.matmul %8, %7, %cst_10 {dimension_numbers = #tpu.dot_dimension_numbers<[1], [0], [0], [1], [0, 0, 1, 1], [], []>} : vector<128x128xf32>, vector<128x128xf32>, vector<128x128xf32> -> vector<128x128xf32>
    %cst_11 = arith.constant 1.562500e-02 : f32
    %10 = vector.broadcast %cst_11 : f32 to vector<128x128xf32>
    %11 = arith.mulf %9, %10 : vector<128x128xf32>
    %12 = arith.subf %5, %11 : vector<128x128xf32>
    %13 = arith.mulf %12, %12 : vector<128x128xf32>
    %cst_12 = arith.constant dense<0.000000e+00> : vector<128x128xf32>
    %14 = tpu.matmul %6, %13, %cst_12 {dimension_numbers = #tpu.dot_dimension_numbers<[1], [0], [0], [1], [0, 0, 1, 1], [], []>} : vector<128x128xf32>, vector<128x128xf32>, vector<128x128xf32> -> vector<128x128xf32>
    %cst_13 = arith.constant dense<0.000000e+00> : vector<128x128xf32>
    %15 = tpu.matmul %14, %7, %cst_13 {dimension_numbers = #tpu.dot_dimension_numbers<[1], [0], [0], [1], [0, 0, 1, 1], [], []>} : vector<128x128xf32>, vector<128x128xf32>, vector<128x128xf32> -> vector<128x128xf32>
    %cst_14 = arith.constant 1.562500e-02 : f32
    %16 = vector.broadcast %cst_14 : f32 to vector<128x128xf32>
    %17 = arith.mulf %15, %16 : vector<128x128xf32>
    %cst_15 = arith.constant 9.99999974E-6 : f32
    %18 = vector.broadcast %cst_15 : f32 to vector<128x128xf32>
    %19 = arith.addf %17, %18 : vector<128x128xf32>
    %20 = math.rsqrt %19 : vector<128x128xf32>
    %21 = arith.mulf %12, %20 : vector<128x128xf32>
    %c0_16 = arith.constant 0 : index
    %c0_17 = arith.constant 0 : index
    %22 = vector.load %arg4[%c0_16, %c0_17] : memref<1x128xf32, #tpu.memory_space<vmem>>, vector<1x128xf32>
    %23 = vector.broadcast %22 : vector<1x128xf32> to vector<128x128xf32>
    %24 = arith.mulf %21, %23 : vector<128x128xf32>
    %c0_18 = arith.constant 0 : index
    %c0_19 = arith.constant 0 : index
    %25 = vector.load %arg5[%c0_18, %c0_19] : memref<1x128xf32, #tpu.memory_space<vmem>>, vector<1x128xf32>
    %26 = vector.broadcast %25 : vector<1x128xf32> to vector<128x128xf32>
    %27 = arith.addf %24, %26 : vector<128x128xf32>
    %cst_20 = arith.constant 2.000000e-01 : f32
    %28 = vector.broadcast %cst_20 : f32 to vector<128x128xf32>
    %29 = arith.mulf %28, %27 : vector<128x128xf32>
    %30 = arith.maximumf %27, %29 : vector<128x128xf32>
    %c0_21 = arith.constant 0 : index
    %c0_22 = arith.constant 0 : index
    %31 = vector.load %arg8[%c0_21, %c0_22] : memref<128x128xf32, #tpu.memory_space<vmem>>, vector<128x128xf32>
    tpu.vector_store %arg8[%c0_21, %c0_22], %30 {strides = array<i32>} : memref<128x128xf32, #tpu.memory_space<vmem>>, vector<128x128xf32>,
    return
  }
  func.func @transform_0(%arg0: i32) -> (i32, i32) {
    %c0_i32 = arith.constant 0 : i32
    %c0_i32_0 = arith.constant 0 : i32
    return %arg0, %c0_i32 : i32, i32
  }
  func.func @transform_1(%arg0: i32) -> (i32, i32) {
    %c0_i32 = arith.constant 0 : i32
    %c0_i32_0 = arith.constant 0 : i32
    %c0_i32_1 = arith.constant 0 : i32
    return %c0_i32, %c0_i32_0 : i32, i32
  }
  func.func @transform_2(%arg0: i32) -> (i32, i32) {
    %c0_i32 = arith.constant 0 : i32
    %c0_i32_0 = arith.constant 0 : i32
    %c0_i32_1 = arith.constant 0 : i32
    return %c0_i32, %c0_i32_0 : i32, i32
  }
  func.func @transform_3(%arg0: i32) -> (i32, i32) {
    %c0_i32 = arith.constant 0 : i32
    %c0_i32_0 = arith.constant 0 : i32
    %c0_i32_1 = arith.constant 0 : i32
    return %c0_i32, %c0_i32_0 : i32, i32
  }
  func.func @transform_4(%arg0: i32) -> (i32, i32) {
    %c0_i32 = arith.constant 0 : i32
    %c0_i32_0 = arith.constant 0 : i32
    %c0_i32_1 = arith.constant 0 : i32
    return %c0_i32, %c0_i32_0 : i32, i32
  }
  func.func @transform_5(%arg0: i32) -> (i32, i32) {
    %c0_i32 = arith.constant 0 : i32
    %c0_i32_0 = arith.constant 0 : i32
    %c0_i32_1 = arith.constant 0 : i32
    return %c0_i32, %c0_i32_0 : i32, i32
  }
  func.func @transform_6(%arg0: i32) -> (i32, i32) {
    %c0_i32 = arith.constant 0 : i32
    %c0_i32_0 = arith.constant 0 : i32
    %c0_i32_1 = arith.constant 0 : i32
    return %c0_i32, %c0_i32_0 : i32, i32
  }
  func.func @transform_7(%arg0: i32) -> (i32, i32) {
    %c0_i32 = arith.constant 0 : i32
    %c0_i32_0 = arith.constant 0 : i32
    return %arg0, %c0_i32 : i32, i32
  }
}

</mosaic_0001>

<llo_original>
// kernel: tpu_custom_call.1
$region0: #{tpu_custom_call.1}
  #allocation0 [shape = 'u32[]', space=smem, size = 0x4, offset = 0x4, fixed_abs, tag = 'smem constant byte address 0x4 - core index']
  #allocation1 [shape = 'u32[72,128]{1,0:T(1,128)}', space=vmem, size = 0x9000, scoped, tag = 'internal scratch']
  %s0 = inlined_call_operand.hbm [shape: bf16[128,128], index: 0, kind: input, shape index: {}]
  %s1 = inlined_call_operand.hbm [shape: bf16[128,128], index: 1, kind: input, shape index: {}]
  %s2 = inlined_call_operand.vmem [shape: f32[1,128], index: 2, kind: input, shape index: {}]
  %s3 = inlined_call_operand.vmem [shape: f32[1,128], index: 3, kind: input, shape index: {}]
  %s4 = inlined_call_operand.vmem [shape: f32[1,128], index: 4, kind: input, shape index: {}]
  %s5 = inlined_call_operand.hbm [shape: f32[128,128], index: 5, kind: input, shape index: {}]
  %s6 = inlined_call_operand.hbm [shape: f32[128,128], index: 6, kind: input, shape index: {}]
  %s7 = inlined_call_operand.hbm [shape: f32[128,128], index: 7, kind: output, shape index: {}]
  %s8 = sld [smem:[#allocation0]]
  $region54: #{tpu_custom_call.1} parent=0
    _
  %s10 = ssub.s32 1, %s8
  %s11 = scalar_select 0, %s10, %s8
  $region1: #{tpu_custom_call.1} parent=0
    #allocation2 [shape = 'u8[32768]{0}', space=vmem, size = 0x8000, scoped, tag = 'input window, operand 0, single buffered']
    #allocation3 [shape = 's32[1]{0}', space=sflag, size = 0x4, scoped, tag = 'scoped memory for tpu_custom_call.1']
    #allocation4 [shape = 's32[1]{0}', space=sflag, size = 0x4, scoped, tag = 'scoped memory for tpu_custom_call.1']
    #allocation5 [shape = 'u8[32768]{0}', space=vmem, size = 0x8000, scoped, tag = 'input window, operand 1, single buffered']
    #allocation6 [shape = 's32[1]{0}', space=sflag, size = 0x4, scoped, tag = 'scoped memory for tpu_custom_call.1']
    #allocation7 [shape = 'u8[65536]{0}', space=vmem, size = 0x10000, scoped, tag = 'input window, operand 5, single buffered']
    #allocation8 [shape = 'u8[65536]{0}', space=vmem, size = 0x10000, scoped, tag = 'input window, operand 6, single buffered']
    #allocation9 [shape = 's32[1]{0}', space=sflag, size = 0x4, scoped, tag = 'scoped memory for tpu_custom_call.1']
    #allocation10 [shape = 'u8[65536]{0}', space=vmem, size = 0x10000, scoped, tag = 'output window, operand 0, single buffered']
    %12 = vsyncpa [#allocation3], 0
    %13 = vsyncpa [#allocation6], 0
    %14 = vsyncpa [#allocation9], 0
    %15 = vsyncpa [#allocation4], 0
    // Predicated region
    $region2: #{tpu_custom_call.1} parent=1 // pred_check
      _
    $region3: #{tpu_custom_call.1} parent=1 // pred_check_branch
      %17 = sbr.rel (0) target = $region5
    $region4: #{tpu_custom_call.1} parent=1 // pred_region
      %19 = vsyncadd [#allocation3], 0
      %s20 = sshll.u32 %s0, 4
      %s21 = int_to_ptr.hbm [resolvable:$true] %s20
      %s22 = sshll.u32 [#allocation2], 4
      %s23 = int_to_ptr.vmem [resolvable:$true] %s22
      %28 = dma.hbm_to_vmem [thread:$0]  %s21, 1024, %s23, [#allocation3], 64, 64, 4
    $region5: #{tpu_custom_call.1} parent=1 // pred_fallthru
      _
    // Predicated region
    $region6: #{tpu_custom_call.1} parent=1 // pred_check
      _
    $region7: #{tpu_custom_call.1} parent=1 // pred_check_branch
      %30 = sbr.rel (0) target = $region9
    $region8: #{tpu_custom_call.1} parent=1 // pred_region
      %32 = vsyncadd [#allocation6], 0
      %s33 = sshll.u32 %s1, 4
      %s34 = int_to_ptr.hbm [resolvable:$true] %s33
      %s35 = sshll.u32 [#allocation5], 4
      %s36 = int_to_ptr.vmem [resolvable:$true] %s35
      %41 = dma.hbm_to_vmem [thread:$0]  %s34, 1024, %s36, [#allocation6], 64, 64, 4
    $region9: #{tpu_custom_call.1} parent=1 // pred_fallthru
      _
    // Predicated region
    $region10: #{tpu_custom_call.1} parent=1 // pred_check
      _
    $region11: #{tpu_custom_call.1} parent=1 // pred_check_branch
      %43 = sbr.rel (0) target = $region13
    $region12: #{tpu_custom_call.1} parent=1 // pred_region
      _
    $region13: #{tpu_custom_call.1} parent=1 // pred_fallthru
      _
    // Predicated region
    $region14: #{tpu_custom_call.1} parent=1 // pred_check
      _
    $region15: #{tpu_custom_call.1} parent=1 // pred_check_branch
      %45 = sbr.rel (0) target = $region17
    $region16: #{tpu_custom_call.1} parent=1 // pred_region
      _
    $region17: #{tpu_custom_call.1} parent=1 // pred_fallthru
      _
    // Predicated region
    $region18: #{tpu_custom_call.1} parent=1 // pred_check
      _
    $region19: #{tpu_custom_call.1} parent=1 // pred_check_branch
      %47 = sbr.rel (0) target = $region21
    $region20: #{tpu_custom_call.1} parent=1 // pred_region
      _
    $region21: #{tpu_custom_call.1} parent=1 // pred_fallthru
      _
    // Predicated region
    $region22: #{tpu_custom_call.1} parent=1 // pred_check
      _
    $region23: #{tpu_custom_call.1} parent=1 // pred_check_branch
      %49 = sbr.rel (0) target = $region25
    $region24: #{tpu_custom_call.1} parent=1 // pred_region
      %51 = vsyncadd [#allocation6], 0
      %s52 = sshll.u32 %s5, 4
      %s53 = int_to_ptr.hbm [resolvable:$true] %s52
      %s54 = sshll.u32 [#allocation7], 4
      %s55 = int_to_ptr.vmem [resolvable:$true] %s54
      %60 = dma.hbm_to_vmem [thread:$0]  %s53, 2048, %s55, [#allocation6], 128, 128, 8
    $region25: #{tpu_custom_call.1} parent=1 // pred_fallthru
      _
    // Predicated region
    $region26: #{tpu_custom_call.1} parent=1 // pred_check
      _
    $region27: #{tpu_custom_call.1} parent=1 // pred_check_branch
      %62 = sbr.rel (0) target = $region29
    $region28: #{tpu_custom_call.1} parent=1 // pred_region
      %64 = vsyncadd [#allocation9], 0
      %s65 = sshll.u32 %s6, 4
      %s66 = int_to_ptr.hbm [resolvable:$true] %s65
      %s67 = sshll.u32 [#allocation8], 4
      %s68 = int_to_ptr.vmem [resolvable:$true] %s67
      %73 = dma.hbm_to_vmem [thread:$0]  %s66, 2048, %s68, [#allocation9], 128, 128, 8
    $region29: #{tpu_custom_call.1} parent=1 // pred_fallthru
      _
    // Predicated region
    $region30: #{tpu_custom_call.1} parent=1 // pred_check
      _
    $region31: #{tpu_custom_call.1} parent=1 // pred_check_branch
      %75 = sbr.rel (0) target = $region33
    $region32: #{tpu_custom_call.1} parent=1 // pred_region
      %77 = dma.done [#allocation3], 1024
    $region33: #{tpu_custom_call.1} parent=1 // pred_fallthru
      _
    // Predicated region
    $region34: #{tpu_custom_call.1} parent=1 // pred_check
      _
    $region35: #{tpu_custom_call.1} parent=1 // pred_check_branch
      %79 = sbr.rel (0) target = $region37
    $region36: #{tpu_custom_call.1} parent=1 // pred_region
      %81 = dma.done [#allocation6], 1024
    $region37: #{tpu_custom_call.1} parent=1 // pred_fallthru
      _
    // Predicated region
    $region38: #{tpu_custom_call.1} parent=1 // pred_check
      _
    $region39: #{tpu_custom_call.1} parent=1 // pred_check_branch
      %83 = sbr.rel (0) target = $region41
    $region40: #{tpu_custom_call.1} parent=1 // pred_region
      %85 = dma.done [#allocation6], 2048
    $region41: #{tpu_custom_call.1} parent=1 // pred_fallthru
      _
    // Predicated region
    $region42: #{tpu_custom_call.1} parent=1 // pred_check
      _
    $region43: #{tpu_custom_call.1} parent=1 // pred_check_branch
      %87 = sbr.rel (0) target = $region45
    $region44: #{tpu_custom_call.1} parent=1 // pred_region
      %89 = dma.done [#allocation9], 2048
    $region45: #{tpu_custom_call.1} parent=1 // pred_fallthru
      _
    %v90 = vld [vmem:[#allocation2] sm:$0xf]
    %v91 = vld [vmem:[#allocation2 + $0x4] sm:$0xf]
    %v92 = vld [vmem:[#allocation2 + $0x8] sm:$0xf]
    %v93 = vld [vmem:[#allocation2 + $0xc] sm:$0xf]
    %v94 = vld [vmem:[#allocation2 + $0x10] sm:$0xf]
    %v95 = vld [vmem:[#allocation2 + $0x14] sm:$0xf]
    %v96 = vld [vmem:[#allocation2 + $0x18] sm:$0xf]
    %v97 = vld [vmem:[#allocation2 + $0x1c] sm:$0xf]
    %v98 = vld [vmem:[#allocation2 + $0x20] sm:$0xf]
    %v99 = vld [vmem:[#allocation2 + $0x24] sm:$0xf]
    %v100 = vld [vmem:[#allocation2 + $0x28] sm:$0xf]
    %v101 = vld [vmem:[#allocation2 + $0x2c] sm:$0xf]
    %v102 = vld [vmem:[#allocation2 + $0x30] sm:$0xf]
    %v103 = vld [vmem:[#allocation2 + $0x34] sm:$0xf]
    %v104 = vld [vmem:[#allocation2 + $0x38] sm:$0xf]
    %v105 = vld [vmem:[#allocation2 + $0x3c] sm:$0xf]
    %v106 = vld [vmem:[#allocation5] sm:$0xf]
    %v107 = vld [vmem:[#allocation5 + $0x4] sm:$0xf]
    %v108 = vld [vmem:[#allocation5 + $0x8] sm:$0xf]
    %v109 = vld [vmem:[#allocation5 + $0xc] sm:$0xf]
    %v110 = vld [vmem:[#allocation5 + $0x10] sm:$0xf]
    %v111 = vld [vmem:[#allocation5 + $0x14] sm:$0xf]
    %v112 = vld [vmem:[#allocation5 + $0x18] sm:$0xf]
    %v113 = vld [vmem:[#allocation5 + $0x1c] sm:$0xf]
    %v114 = vld [vmem:[#allocation5 + $0x20] sm:$0xf]
    %v115 = vld [vmem:[#allocation5 + $0x24] sm:$0xf]
    %v116 = vld [vmem:[#allocation5 + $0x28] sm:$0xf]
    %v117 = vld [vmem:[#allocation5 + $0x2c] sm:$0xf]
    %v118 = vld [vmem:[#allocation5 + $0x30] sm:$0xf]
    %v119 = vld [vmem:[#allocation5 + $0x34] sm:$0xf]
    %v120 = vld [vmem:[#allocation5 + $0x38] sm:$0xf]
    %v121 = vld [vmem:[#allocation5 + $0x3c] sm:$0xf]
    %v122 = vld [vmem:[%s2] sm:$0x1]
    %v124 = vperm.slane %v122, 0
    %v142 = vunpack.c.l.b16 %v90
    %v143 = vunpack.c.l.b16 %v91
    %v144 = vunpack.c.l.b16 %v92
    %v145 = vunpack.c.l.b16 %v93
    %v146 = vunpack.c.l.b16 %v94
    %v147 = vunpack.c.l.b16 %v95
    %v148 = vunpack.c.l.b16 %v96
    %v149 = vunpack.c.l.b16 %v97
    %v150 = vunpack.c.l.b16 %v98
    %v151 = vunpack.c.l.b16 %v99
    %v152 = vunpack.c.l.b16 %v100
    %v153 = vunpack.c.l.b16 %v101
    %v154 = vunpack.c.l.b16 %v102
    %v155 = vunpack.c.l.b16 %v103
    %v156 = vunpack.c.l.b16 %v104
    %v157 = vunpack.c.l.b16 %v105
    %v158 = vpack.c.b16 %v143, %v142
    %v159 = vpack.c.b16 %v145, %v144
    %v160 = vpack.c.b16 %v147, %v146
    %v161 = vpack.c.b16 %v149, %v148
    %v162 = vpack.c.b16 %v151, %v150
    %v163 = vpack.c.b16 %v153, %v152
    %v164 = vpack.c.b16 %v155, %v154
    %v165 = vpack.c.b16 %v157, %v156
    %v190 = vunpack.c.l.b16 %v106
    %v191 = vunpack.c.l.b16 %v107
    %v192 = vunpack.c.l.b16 %v108
    %v193 = vunpack.c.l.b16 %v109
    %v194 = vunpack.c.l.b16 %v110
    %v195 = vunpack.c.l.b16 %v111
    %v196 = vunpack.c.l.b16 %v112
    %v197 = vunpack.c.l.b16 %v113
    %v198 = vunpack.c.l.b16 %v114
    %v199 = vunpack.c.l.b16 %v115
    %v200 = vunpack.c.l.b16 %v116
    %v201 = vunpack.c.l.b16 %v117
    %v202 = vunpack.c.l.b16 %v118
    %v203 = vunpack.c.l.b16 %v119
    %v204 = vunpack.c.l.b16 %v120
    %v205 = vunpack.c.l.b16 %v121
    %v206 = vpack.c.b16 %v191, %v190
    %v207 = vpack.c.b16 %v193, %v192
    %v208 = vpack.c.b16 %v195, %v194
    %v209 = vpack.c.b16 %v197, %v196
    %v210 = vpack.c.b16 %v199, %v198
    %v211 = vpack.c.b16 %v201, %v200
    %v212 = vpack.c.b16 %v203, %v202
    %v213 = vpack.c.b16 %v205, %v204
    %222 = vmatpush.bf16.msra.mxu0 %v213
    %223 = vmatpush.bf16.msra.mxu0 %v212
    %224 = vmatpush.bf16.msra.mxu0 %v211
    %225 = vmatpush.bf16.msra.mxu0 %v210
    %226 = vmatpush.bf16.msra.mxu0 %v209
    %227 = vmatpush.bf16.msra.mxu0 %v208
    %228 = vmatpush.bf16.msra.mxu0 %v207
    %229 = vmatpush.bf16.msra.mxu0 %v206
    %230 = vmatmul.bf16.gmra.mxu0 %v158
    %v231 = vpop.f32.mrf.mxu0
    %v232 = vadd.f32 %v124, %v231
    %v233 = vpop.f32.mrf.mxu0
    %v234 = vadd.f32 %v124, %v233
    %235 = vmatmul.bf16.gmra.mxu0 %v159
    %v236 = vpop.f32.mrf.mxu0
    %v237 = vadd.f32 %v124, %v236
    %v238 = vpop.f32.mrf.mxu0
    %v239 = vadd.f32 %v124, %v238
    %240 = vmatmul.bf16.gmra.mxu0 %v160
    %v241 = vpop.f32.mrf.mxu0
    %v242 = vadd.f32 %v124, %v241
    %v243 = vpop.f32.mrf.mxu0
    %v244 = vadd.f32 %v124, %v243
    %245 = vmatmul.bf16.gmra.mxu0 %v161
    %v246 = vpop.f32.mrf.mxu0
    %v247 = vadd.f32 %v124, %v246
    %v248 = vpop.f32.mrf.mxu0
    %v249 = vadd.f32 %v124, %v248
    %250 = vmatmul.bf16.gmra.mxu0 %v162
    %v251 = vpop.f32.mrf.mxu0
    %v252 = vadd.f32 %v124, %v251
    %v253 = vpop.f32.mrf.mxu0
    %v254 = vadd.f32 %v124, %v253
    %255 = vmatmul.bf16.gmra.mxu0 %v163
    %v256 = vpop.f32.mrf.mxu0
    %v257 = vadd.f32 %v124, %v256
    %v258 = vpop.f32.mrf.mxu0
    %v259 = vadd.f32 %v124, %v258
    %260 = vmatmul.bf16.gmra.mxu0 %v164
    %v261 = vpop.f32.mrf.mxu0
    %v262 = vadd.f32 %v124, %v261
    %v263 = vpop.f32.mrf.mxu0
    %v264 = vadd.f32 %v124, %v263
    %265 = vmatmul.bf16.gmra.mxu0 %v165
    %v266 = vpop.f32.mrf.mxu0
    %v267 = vadd.f32 %v124, %v266
    %v268 = vpop.f32.mrf.mxu0
    %v269 = vadd.f32 %v124, %v268
    %270 = vdwg.mxu0
    %v271 = vld [vmem:[#allocation7] sm:$0xff]
    %v272 = vld [vmem:[#allocation7 + $0x8] sm:$0xff]
    %v273 = vld [vmem:[#allocation7 + $0x10] sm:$0xff]
    %v274 = vld [vmem:[#allocation7 + $0x18] sm:$0xff]
    %v275 = vld [vmem:[#allocation7 + $0x20] sm:$0xff]
    %v276 = vld [vmem:[#allocation7 + $0x28] sm:$0xff]
    %v277 = vld [vmem:[#allocation7 + $0x30] sm:$0xff]
    %v278 = vld [vmem:[#allocation7 + $0x38] sm:$0xff]
    %v279 = vld [vmem:[#allocation7 + $0x40] sm:$0xff]
    %v280 = vld [vmem:[#allocation7 + $0x48] sm:$0xff]
    %v281 = vld [vmem:[#allocation7 + $0x50] sm:$0xff]
    %v282 = vld [vmem:[#allocation7 + $0x58] sm:$0xff]
    %v283 = vld [vmem:[#allocation7 + $0x60] sm:$0xff]
    %v284 = vld [vmem:[#allocation7 + $0x68] sm:$0xff]
    %v285 = vld [vmem:[#allocation7 + $0x70] sm:$0xff]
    %v286 = vld [vmem:[#allocation7 + $0x78] sm:$0xff]
    %v287 = vld [vmem:[#allocation8] sm:$0xff]
    %v288 = vld [vmem:[#allocation8 + $0x8] sm:$0xff]
    %v289 = vld [vmem:[#allocation8 + $0x10] sm:$0xff]
    %v290 = vld [vmem:[#allocation8 + $0x18] sm:$0xff]
    %v291 = vld [vmem:[#allocation8 + $0x20] sm:$0xff]
    %v292 = vld [vmem:[#allocation8 + $0x28] sm:$0xff]
    %v293 = vld [vmem:[#allocation8 + $0x30] sm:$0xff]
    %v294 = vld [vmem:[#allocation8 + $0x38] sm:$0xff]
    %v295 = vld [vmem:[#allocation8 + $0x40] sm:$0xff]
    %v296 = vld [vmem:[#allocation8 + $0x48] sm:$0xff]
    %v297 = vld [vmem:[#allocation8 + $0x50] sm:$0xff]
    %v298 = vld [vmem:[#allocation8 + $0x58] sm:$0xff]
    %v299 = vld [vmem:[#allocation8 + $0x60] sm:$0xff]
    %v300 = vld [vmem:[#allocation8 + $0x68] sm:$0xff]
    %v301 = vld [vmem:[#allocation8 + $0x70] sm:$0xff]
    %v302 = vld [vmem:[#allocation8 + $0x78] sm:$0xff]
    %303 = vmatpush.msra.mxu0 %v269
    %304 = vmatpush.msra.mxu0 %v267
    %305 = vmatpush.msra.mxu0 %v264
    %306 = vmatpush.msra.mxu0 %v262
    %307 = vmatpush.msra.mxu0 %v259
    %308 = vmatpush.msra.mxu0 %v257
    %309 = vmatpush.msra.mxu0 %v254
    %310 = vmatpush.msra.mxu0 %v252
    %311 = vmatpush.msra.mxu0 %v249
    %312 = vmatpush.msra.mxu0 %v247
    %313 = vmatpush.msra.mxu0 %v244
    %314 = vmatpush.msra.mxu0 %v242
    %315 = vmatpush.msra.mxu0 %v239
    %316 = vmatpush.msra.mxu0 %v237
    %317 = vmatpush.msra.mxu0 %v234
    %318 = vmatpush.msra.mxu0 %v232
    %319 = vmatmul.f32.gmra.mxu0 %v271
    %v320 = vpop.f32.mrf.mxu0
    %v321 = vadd.f32 0.0, %v320
    %322 = vmatmul.f32.gmra.mxu0 %v272
    %v323 = vpop.f32.mrf.mxu0
    %v324 = vadd.f32 0.0, %v323
    %325 = vmatmul.f32.gmra.mxu0 %v273
    %v326 = vpop.f32.mrf.mxu0
    %v327 = vadd.f32 0.0, %v326
    %328 = vmatmul.f32.gmra.mxu0 %v274
    %v329 = vpop.f32.mrf.mxu0
    %v330 = vadd.f32 0.0, %v329
    %331 = vmatmul.f32.gmra.mxu0 %v275
    %v332 = vpop.f32.mrf.mxu0
    %v333 = vadd.f32 0.0, %v332
    %334 = vmatmul.f32.gmra.mxu0 %v276
    %v335 = vpop.f32.mrf.mxu0
    %v336 = vadd.f32 0.0, %v335
    %337 = vmatmul.f32.gmra.mxu0 %v277
    %v338 = vpop.f32.mrf.mxu0
    %v339 = vadd.f32 0.0, %v338
    %340 = vmatmul.f32.gmra.mxu0 %v278
    %v341 = vpop.f32.mrf.mxu0
    %v342 = vadd.f32 0.0, %v341
    %343 = vmatmul.f32.gmra.mxu0 %v279
    %v344 = vpop.f32.mrf.mxu0
    %v345 = vadd.f32 0.0, %v344
    %346 = vmatmul.f32.gmra.mxu0 %v280
    %v347 = vpop.f32.mrf.mxu0
    %v348 = vadd.f32 0.0, %v347
    %349 = vmatmul.f32.gmra.mxu0 %v281
    %v350 = vpop.f32.mrf.mxu0
    %v351 = vadd.f32 0.0, %v350
    %352 = vmatmul.f32.gmra.mxu0 %v282
    %v353 = vpop.f32.mrf.mxu0
    %v354 = vadd.f32 0.0, %v353
    %355 = vmatmul.f32.gmra.mxu0 %v283
    %v356 = vpop.f32.mrf.mxu0
    %v357 = vadd.f32 0.0, %v356
    %358 = vmatmul.f32.gmra.mxu0 %v284
    %v359 = vpop.f32.mrf.mxu0
    %v360 = vadd.f32 0.0, %v359
    %361 = vmatmul.f32.gmra.mxu0 %v285
    %v362 = vpop.f32.mrf.mxu0
    %v363 = vadd.f32 0.0, %v362
    %364 = vmatmul.f32.gmra.mxu0 %v286
    %v365 = vpop.f32.mrf.mxu0
    %v366 = vadd.f32 0.0, %v365
    %367 = vdwg.mxu0
    %368 = vmatpush.msra.mxu0 %v302
    %369 = vmatpush.msra.mxu0 %v301
    %370 = vmatpush.msra.mxu0 %v300
    %371 = vmatpush.msra.mxu0 %v299
    %372 = vmatpush.msra.mxu0 %v298
    %373 = vmatpush.msra.mxu0 %v297
    %374 = vmatpush.msra.mxu0 %v296
    %375 = vmatpush.msra.mxu0 %v295
    %376 = vmatpush.msra.mxu0 %v294
    %377 = vmatpush.msra.mxu0 %v293
    %378 = vmatpush.msra.mxu0 %v292
    %379 = vmatpush.msra.mxu0 %v291
    %380 = vmatpush.msra.mxu0 %v290
    %381 = vmatpush.msra.mxu0 %v289
    %382 = vmatpush.msra.mxu0 %v288
    %383 = vmatpush.msra.mxu0 %v287
    %384 = vmatmul.f32.gmra.mxu0 %v321
    %v385 = vpop.f32.mrf.mxu0
    %v386 = vadd.f32 0.0, %v385
    %387 = vmatmul.f32.gmra.mxu0 %v324
    %v388 = vpop.f32.mrf.mxu0
    %v389 = vadd.f32 0.0, %v388
    %390 = vmatmul.f32.gmra.mxu0 %v327
    %v391 = vpop.f32.mrf.mxu0
    %v392 = vadd.f32 0.0, %v391
    %393 = vmatmul.f32.gmra.mxu0 %v330
    %v394 = vpop.f32.mrf.mxu0
    %v395 = vadd.f32 0.0, %v394
    %396 = vmatmul.f32.gmra.mxu0 %v333
    %v397 = vpop.f32.mrf.mxu0
    %v398 = vadd.f32 0.0, %v397
    %399 = vmatmul.f32.gmra.mxu0 %v336
    %v400 = vpop.f32.mrf.mxu0
    %v401 = vadd.f32 0.0, %v400
    %402 = vmatmul.f32.gmra.mxu0 %v339
    %v403 = vpop.f32.mrf.mxu0
    %v404 = vadd.f32 0.0, %v403
    %405 = vmatmul.f32.gmra.mxu0 %v342
    %v406 = vpop.f32.mrf.mxu0
    %v407 = vadd.f32 0.0, %v406
    %408 = vmatmul.f32.gmra.mxu0 %v345
    %v409 = vpop.f32.mrf.mxu0
    %v410 = vadd.f32 0.0, %v409
    %411 = vmatmul.f32.gmra.mxu0 %v348
    %v412 = vpop.f32.mrf.mxu0
    %v413 = vadd.f32 0.0, %v412
    %414 = vmatmul.f32.gmra.mxu0 %v351
    %v415 = vpop.f32.mrf.mxu0
    %v416 = vadd.f32 0.0, %v415
    %417 = vmatmul.f32.gmra.mxu0 %v354
    %v418 = vpop.f32.mrf.mxu0
    %v419 = vadd.f32 0.0, %v418
    %420 = vmatmul.f32.gmra.mxu0 %v357
    %v421 = vpop.f32.mrf.mxu0
    %v422 = vadd.f32 0.0, %v421
    %423 = vmatmul.f32.gmra.mxu0 %v360
    %v424 = vpop.f32.mrf.mxu0
    %v425 = vadd.f32 0.0, %v424
    %426 = vmatmul.f32.gmra.mxu0 %v363
    %v427 = vpop.f32.mrf.mxu0
    %v428 = vadd.f32 0.0, %v427
    %429 = vmatmul.f32.gmra.mxu0 %v366
    %v430 = vpop.f32.mrf.mxu0
    %v431 = vadd.f32 0.0, %v430
    %432 = vdwg.mxu0
    %v433 = vmul.f32 %v386, 0.015625
    %v434 = vmul.f32 %v389, 0.015625
    %v435 = vmul.f32 %v392, 0.015625
    %v436 = vmul.f32 %v395, 0.015625
    %v437 = vmul.f32 %v398, 0.015625
    %v438 = vmul.f32 %v401, 0.015625
    %v439 = vmul.f32 %v404, 0.015625
    %v440 = vmul.f32 %v407, 0.015625
    %v441 = vmul.f32 %v410, 0.015625
    %v442 = vmul.f32 %v413, 0.015625
    %v443 = vmul.f32 %v416, 0.015625
    %v444 = vmul.f32 %v419, 0.015625
    %v445 = vmul.f32 %v422, 0.015625
    %v446 = vmul.f32 %v425, 0.015625
    %v447 = vmul.f32 %v428, 0.015625
    %v448 = vmul.f32 %v431, 0.015625
    %v449 = vsub.f32 %v232, %v433
    %v450 = vsub.f32 %v234, %v434
    %v451 = vsub.f32 %v237, %v435
    %v452 = vsub.f32 %v239, %v436
    %v453 = vsub.f32 %v242, %v437
    %v454 = vsub.f32 %v244, %v438
    %v455 = vsub.f32 %v247, %v439
    %v456 = vsub.f32 %v249, %v440
    %v457 = vsub.f32 %v252, %v441
    %v458 = vsub.f32 %v254, %v442
    %v459 = vsub.f32 %v257, %v443
    %v460 = vsub.f32 %v259, %v444
    %v461 = vsub.f32 %v262, %v445
    %v462 = vsub.f32 %v264, %v446
    %v463 = vsub.f32 %v267, %v447
    %v464 = vsub.f32 %v269, %v448
    %v465 = vmul.f32 %v449, %v449
    %v466 = vmul.f32 %v450, %v450
    %v467 = vmul.f32 %v451, %v451
    %v468 = vmul.f32 %v452, %v452
    %v469 = vmul.f32 %v453, %v453
    %v470 = vmul.f32 %v454, %v454
    %v471 = vmul.f32 %v455, %v455
    %v472 = vmul.f32 %v456, %v456
    %v473 = vmul.f32 %v457, %v457
    %v474 = vmul.f32 %v458, %v458
    %v475 = vmul.f32 %v459, %v459
    %v476 = vmul.f32 %v460, %v460
    %v477 = vmul.f32 %v461, %v461
    %v478 = vmul.f32 %v462, %v462
    %v479 = vmul.f32 %v463, %v463
    %v480 = vmul.f32 %v464, %v464
    %481 = vmatpush.msra.mxu0 %v480
    %482 = vmatpush.msra.mxu0 %v479
    %483 = vmatpush.msra.mxu0 %v478
    %484 = vmatpush.msra.mxu0 %v477
    %485 = vmatpush.msra.mxu0 %v476
    %486 = vmatpush.msra.mxu0 %v475
    %487 = vmatpush.msra.mxu0 %v474
    %488 = vmatpush.msra.mxu0 %v473
    %489 = vmatpush.msra.mxu0 %v472
    %490 = vmatpush.msra.mxu0 %v471
    %491 = vmatpush.msra.mxu0 %v470
    %492 = vmatpush.msra.mxu0 %v469
    %493 = vmatpush.msra.mxu0 %v468
    %494 = vmatpush.msra.mxu0 %v467
    %495 = vmatpush.msra.mxu0 %v466
    %496 = vmatpush.msra.mxu0 %v465
    %497 = vmatmul.f32.gmra.mxu0 %v271
    %v498 = vpop.f32.mrf.mxu0
    %v499 = vadd.f32 0.0, %v498
    %500 = vmatmul.f32.gmra.mxu0 %v272
    %v501 = vpop.f32.mrf.mxu0
    %v502 = vadd.f32 0.0, %v501
    %503 = vmatmul.f32.gmra.mxu0 %v273
    %v504 = vpop.f32.mrf.mxu0
    %v505 = vadd.f32 0.0, %v504
    %506 = vmatmul.f32.gmra.mxu0 %v274
    %v507 = vpop.f32.mrf.mxu0
    %v508 = vadd.f32 0.0, %v507
    %509 = vmatmul.f32.gmra.mxu0 %v275
    %v510 = vpop.f32.mrf.mxu0
    %v511 = vadd.f32 0.0, %v510
    %512 = vmatmul.f32.gmra.mxu0 %v276
    %v513 = vpop.f32.mrf.mxu0
    %v514 = vadd.f32 0.0, %v513
    %515 = vmatmul.f32.gmra.mxu0 %v277
    %v516 = vpop.f32.mrf.mxu0
    %v517 = vadd.f32 0.0, %v516
    %518 = vmatmul.f32.gmra.mxu0 %v278
    %v519 = vpop.f32.mrf.mxu0
    %v520 = vadd.f32 0.0, %v519
    %521 = vmatmul.f32.gmra.mxu0 %v279
    %v522 = vpop.f32.mrf.mxu0
    %v523 = vadd.f32 0.0, %v522
    %524 = vmatmul.f32.gmra.mxu0 %v280
    %v525 = vpop.f32.mrf.mxu0
    %v526 = vadd.f32 0.0, %v525
    %527 = vmatmul.f32.gmra.mxu0 %v281
    %v528 = vpop.f32.mrf.mxu0
    %v529 = vadd.f32 0.0, %v528
    %530 = vmatmul.f32.gmra.mxu0 %v282
    %v531 = vpop.f32.mrf.mxu0
    %v532 = vadd.f32 0.0, %v531
    %533 = vmatmul.f32.gmra.mxu0 %v283
    %v534 = vpop.f32.mrf.mxu0
    %v535 = vadd.f32 0.0, %v534
    %536 = vmatmul.f32.gmra.mxu0 %v284
    %v537 = vpop.f32.mrf.mxu0
    %v538 = vadd.f32 0.0, %v537
    %539 = vmatmul.f32.gmra.mxu0 %v285
    %v540 = vpop.f32.mrf.mxu0
    %v541 = vadd.f32 0.0, %v540
    %542 = vmatmul.f32.gmra.mxu0 %v286
    %v543 = vpop.f32.mrf.mxu0
    %v544 = vadd.f32 0.0, %v543
    %545 = vdwg.mxu0
    %546 = vmatpush.msra.mxu0 %v302
    %547 = vmatpush.msra.mxu0 %v301
    %548 = vmatpush.msra.mxu0 %v300
    %549 = vmatpush.msra.mxu0 %v299
    %550 = vmatpush.msra.mxu0 %v298
    %551 = vmatpush.msra.mxu0 %v297
    %552 = vmatpush.msra.mxu0 %v296
    %553 = vmatpush.msra.mxu0 %v295
    %554 = vmatpush.msra.mxu0 %v294
    %555 = vmatpush.msra.mxu0 %v293
    %556 = vmatpush.msra.mxu0 %v292
    %557 = vmatpush.msra.mxu0 %v291
    %558 = vmatpush.msra.mxu0 %v290
    %559 = vmatpush.msra.mxu0 %v289
    %560 = vmatpush.msra.mxu0 %v288
    %561 = vmatpush.msra.mxu0 %v287
    %562 = vmatmul.f32.gmra.mxu0 %v499
    %v563 = vpop.f32.mrf.mxu0
    %v564 = vadd.f32 0.0, %v563
    %565 = vmatmul.f32.gmra.mxu0 %v502
    %v566 = vpop.f32.mrf.mxu0
    %v567 = vadd.f32 0.0, %v566
    %568 = vmatmul.f32.gmra.mxu0 %v505
    %v569 = vpop.f32.mrf.mxu0
    %v570 = vadd.f32 0.0, %v569
    %571 = vmatmul.f32.gmra.mxu0 %v508
    %v572 = vpop.f32.mrf.mxu0
    %v573 = vadd.f32 0.0, %v572
    %574 = vmatmul.f32.gmra.mxu0 %v511
    %v575 = vpop.f32.mrf.mxu0
    %v576 = vadd.f32 0.0, %v575
    %577 = vmatmul.f32.gmra.mxu0 %v514
    %v578 = vpop.f32.mrf.mxu0
    %v579 = vadd.f32 0.0, %v578
    %580 = vmatmul.f32.gmra.mxu0 %v517
    %v581 = vpop.f32.mrf.mxu0
    %v582 = vadd.f32 0.0, %v581
    %583 = vmatmul.f32.gmra.mxu0 %v520
    %v584 = vpop.f32.mrf.mxu0
    %v585 = vadd.f32 0.0, %v584
    %586 = vmatmul.f32.gmra.mxu0 %v523
    %v587 = vpop.f32.mrf.mxu0
    %v588 = vadd.f32 0.0, %v587
    %589 = vmatmul.f32.gmra.mxu0 %v526
    %v590 = vpop.f32.mrf.mxu0
    %v591 = vadd.f32 0.0, %v590
    %592 = vmatmul.f32.gmra.mxu0 %v529
    %v593 = vpop.f32.mrf.mxu0
    %v594 = vadd.f32 0.0, %v593
    %595 = vmatmul.f32.gmra.mxu0 %v532
    %v596 = vpop.f32.mrf.mxu0
    %v597 = vadd.f32 0.0, %v596
    %598 = vmatmul.f32.gmra.mxu0 %v535
    %v599 = vpop.f32.mrf.mxu0
    %v600 = vadd.f32 0.0, %v599
    %601 = vmatmul.f32.gmra.mxu0 %v538
    %v602 = vpop.f32.mrf.mxu0
    %v603 = vadd.f32 0.0, %v602
    %604 = vmatmul.f32.gmra.mxu0 %v541
    %v605 = vpop.f32.mrf.mxu0
    %v606 = vadd.f32 0.0, %v605
    %607 = vmatmul.f32.gmra.mxu0 %v544
    %v608 = vpop.f32.mrf.mxu0
    %v609 = vadd.f32 0.0, %v608
    %610 = vdwg.mxu0
    %v611 = vmul.f32 %v564, 0.015625
    %v612 = vmul.f32 %v567, 0.015625
    %v613 = vmul.f32 %v570, 0.015625
    %v614 = vmul.f32 %v573, 0.015625
    %v615 = vmul.f32 %v576, 0.015625
    %v616 = vmul.f32 %v579, 0.015625
    %v617 = vmul.f32 %v582, 0.015625
    %v618 = vmul.f32 %v585, 0.015625
    %v619 = vmul.f32 %v588, 0.015625
    %v620 = vmul.f32 %v591, 0.015625
    %v621 = vmul.f32 %v594, 0.015625
    %v622 = vmul.f32 %v597, 0.015625
    %v623 = vmul.f32 %v600, 0.015625
    %v624 = vmul.f32 %v603, 0.015625
    %v625 = vmul.f32 %v606, 0.015625
    %v626 = vmul.f32 %v609, 0.015625
    %v627 = vadd.f32 %v611, 1e-05
    %v628 = vadd.f32 %v612, 1e-05
    %v629 = vadd.f32 %v613, 1e-05
    %v630 = vadd.f32 %v614, 1e-05
    %v631 = vadd.f32 %v615, 1e-05
    %v632 = vadd.f32 %v616, 1e-05
    %v633 = vadd.f32 %v617, 1e-05
    %v634 = vadd.f32 %v618, 1e-05
    %v635 = vadd.f32 %v619, 1e-05
    %v636 = vadd.f32 %v620, 1e-05
    %v637 = vadd.f32 %v621, 1e-05
    %v638 = vadd.f32 %v622, 1e-05
    %v639 = vadd.f32 %v623, 1e-05
    %v640 = vadd.f32 %v624, 1e-05
    %v641 = vadd.f32 %v625, 1e-05
    %v642 = vadd.f32 %v626, 1e-05
    %v643 = vrsqrt.pop %v627
    %v644 = vmul.f32 %v643, %v627
    %v645 = vmul.f32 %v644, %v643
    %v646 = vmul.f32 0.5, %v645
    %v647 = vsub.f32 1.5, %v646
    %v648 = vmul.f32 %v643, %v647
    %vm649 = vweird.f32 %v627
    %vm650 = vweird.f32 %v643
    %vm651 = vmor %vm649, %vm650
    %v652 = vsel %vm651, %v643, %v648
    %v653 = vrsqrt.pop %v628
    %v654 = vmul.f32 %v653, %v628
    %v655 = vmul.f32 %v654, %v653
    %v656 = vmul.f32 0.5, %v655
    %v657 = vsub.f32 1.5, %v656
    %v658 = vmul.f32 %v653, %v657
    %vm659 = vweird.f32 %v628
    %vm660 = vweird.f32 %v653
    %vm661 = vmor %vm659, %vm660
    %v662 = vsel %vm661, %v653, %v658
    %v663 = vrsqrt.pop %v629
    %v664 = vmul.f32 %v663, %v629
    %v665 = vmul.f32 %v664, %v663
    %v666 = vmul.f32 0.5, %v665
    %v667 = vsub.f32 1.5, %v666
    %v668 = vmul.f32 %v663, %v667
    %vm669 = vweird.f32 %v629
    %vm670 = vweird.f32 %v663
    %vm671 = vmor %vm669, %vm670
    %v672 = vsel %vm671, %v663, %v668
    %v673 = vrsqrt.pop %v630
    %v674 = vmul.f32 %v673, %v630
    %v675 = vmul.f32 %v674, %v673
    %v676 = vmul.f32 0.5, %v675
    %v677 = vsub.f32 1.5, %v676
    %v678 = vmul.f32 %v673, %v677
    %vm679 = vweird.f32 %v630
    %vm680 = vweird.f32 %v673
    %vm681 = vmor %vm679, %vm680
    %v682 = vsel %vm681, %v673, %v678
    %v683 = vrsqrt.pop %v631
    %v684 = vmul.f32 %v683, %v631
    %v685 = vmul.f32 %v684, %v683
    %v686 = vmul.f32 0.5, %v685
    %v687 = vsub.f32 1.5, %v686
    %v688 = vmul.f32 %v683, %v687
    %vm689 = vweird.f32 %v631
    %vm690 = vweird.f32 %v683
    %vm691 = vmor %vm689, %vm690
    %v692 = vsel %vm691, %v683, %v688
    %v693 = vrsqrt.pop %v632
    %v694 = vmul.f32 %v693, %v632
    %v695 = vmul.f32 %v694, %v693
    %v696 = vmul.f32 0.5, %v695
    %v697 = vsub.f32 1.5, %v696
    %v698 = vmul.f32 %v693, %v697
    %vm699 = vweird.f32 %v632
    %vm700 = vweird.f32 %v693
    %vm701 = vmor %vm699, %vm700
    %v702 = vsel %vm701, %v693, %v698
    %v703 = vrsqrt.pop %v633
    %v704 = vmul.f32 %v703, %v633
    %v705 = vmul.f32 %v704, %v703
    %v706 = vmul.f32 0.5, %v705
    %v707 = vsub.f32 1.5, %v706
    %v708 = vmul.f32 %v703, %v707
    %vm709 = vweird.f32 %v633
    %vm710 = vweird.f32 %v703
    %vm711 = vmor %vm709, %vm710
    %v712 = vsel %vm711, %v703, %v708
    %v713 = vrsqrt.pop %v634
    %v714 = vmul.f32 %v713, %v634
    %v715 = vmul.f32 %v714, %v713
    %v716 = vmul.f32 0.5, %v715
    %v717 = vsub.f32 1.5, %v716
    %v718 = vmul.f32 %v713, %v717
    %vm719 = vweird.f32 %v634
    %vm720 = vweird.f32 %v713
    %vm721 = vmor %vm719, %vm720
    %v722 = vsel %vm721, %v713, %v718
    %v723 = vrsqrt.pop %v635
    %v724 = vmul.f32 %v723, %v635
    %v725 = vmul.f32 %v724, %v723
    %v726 = vmul.f32 0.5, %v725
    %v727 = vsub.f32 1.5, %v726
    %v728 = vmul.f32 %v723, %v727
    %vm729 = vweird.f32 %v635
    %vm730 = vweird.f32 %v723
    %vm731 = vmor %vm729, %vm730
    %v732 = vsel %vm731, %v723, %v728
    %v733 = vrsqrt.pop %v636
    %v734 = vmul.f32 %v733, %v636
    %v735 = vmul.f32 %v734, %v733
    %v736 = vmul.f32 0.5, %v735
    %v737 = vsub.f32 1.5, %v736
    %v738 = vmul.f32 %v733, %v737
    %vm739 = vweird.f32 %v636
    %vm740 = vweird.f32 %v733
    %vm741 = vmor %vm739, %vm740
    %v742 = vsel %vm741, %v733, %v738
    %v743 = vrsqrt.pop %v637
    %v744 = vmul.f32 %v743, %v637
    %v745 = vmul.f32 %v744, %v743
    %v746 = vmul.f32 0.5, %v745
    %v747 = vsub.f32 1.5, %v746
    %v748 = vmul.f32 %v743, %v747
    %vm749 = vweird.f32 %v637
    %vm750 = vweird.f32 %v743
    %vm751 = vmor %vm749, %vm750
    %v752 = vsel %vm751, %v743, %v748
    %v753 = vrsqrt.pop %v638
    %v754 = vmul.f32 %v753, %v638
    %v755 = vmul.f32 %v754, %v753
    %v756 = vmul.f32 0.5, %v755
    %v757 = vsub.f32 1.5, %v756
    %v758 = vmul.f32 %v753, %v757
    %vm759 = vweird.f32 %v638
    %vm760 = vweird.f32 %v753
    %vm761 = vmor %vm759, %vm760
    %v762 = vsel %vm761, %v753, %v758
    %v763 = vrsqrt.pop %v639
    %v764 = vmul.f32 %v763, %v639
    %v765 = vmul.f32 %v764, %v763
    %v766 = vmul.f32 0.5, %v765
    %v767 = vsub.f32 1.5, %v766
    %v768 = vmul.f32 %v763, %v767
    %vm769 = vweird.f32 %v639
    %vm770 = vweird.f32 %v763
    %vm771 = vmor %vm769, %vm770
    %v772 = vsel %vm771, %v763, %v768
    %v773 = vrsqrt.pop %v640
    %v774 = vmul.f32 %v773, %v640
    %v775 = vmul.f32 %v774, %v773
    %v776 = vmul.f32 0.5, %v775
    %v777 = vsub.f32 1.5, %v776
    %v778 = vmul.f32 %v773, %v777
    %vm779 = vweird.f32 %v640
    %vm780 = vweird.f32 %v773
    %vm781 = vmor %vm779, %vm780
    %v782 = vsel %vm781, %v773, %v778
    %v783 = vrsqrt.pop %v641
    %v784 = vmul.f32 %v783, %v641
    %v785 = vmul.f32 %v784, %v783
    %v786 = vmul.f32 0.5, %v785
    %v787 = vsub.f32 1.5, %v786
    %v788 = vmul.f32 %v783, %v787
    %vm789 = vweird.f32 %v641
    %vm790 = vweird.f32 %v783
    %vm791 = vmor %vm789, %vm790
    %v792 = vsel %vm791, %v783, %v788
    %v793 = vrsqrt.pop %v642
    %v794 = vmul.f32 %v793, %v642
    %v795 = vmul.f32 %v794, %v793
    %v796 = vmul.f32 0.5, %v795
    %v797 = vsub.f32 1.5, %v796
    %v798 = vmul.f32 %v793, %v797
    %vm799 = vweird.f32 %v642
    %vm800 = vweird.f32 %v793
    %vm801 = vmor %vm799, %vm800
    %v802 = vsel %vm801, %v793, %v798
    %v803 = vmul.f32 %v449, %v652
    %v804 = vmul.f32 %v450, %v662
    %v805 = vmul.f32 %v451, %v672
    %v806 = vmul.f32 %v452, %v682
    %v807 = vmul.f32 %v453, %v692
    %v808 = vmul.f32 %v454, %v702
    %v809 = vmul.f32 %v455, %v712
    %v810 = vmul.f32 %v456, %v722
    %v811 = vmul.f32 %v457, %v732
    %v812 = vmul.f32 %v458, %v742
    %v813 = vmul.f32 %v459, %v752
    %v814 = vmul.f32 %v460, %v762
    %v815 = vmul.f32 %v461, %v772
    %v816 = vmul.f32 %v462, %v782
    %v817 = vmul.f32 %v463, %v792
    %v818 = vmul.f32 %v464, %v802
    %v819 = vld [vmem:[%s3] sm:$0x1]
    %v821 = vperm.slane %v819, 0
    %v823 = vmul.f32 %v803, %v821
    %v824 = vmul.f32 %v804, %v821
    %v825 = vmul.f32 %v805, %v821
    %v826 = vmul.f32 %v806, %v821
    %v827 = vmul.f32 %v807, %v821
    %v828 = vmul.f32 %v808, %v821
    %v829 = vmul.f32 %v809, %v821
    %v830 = vmul.f32 %v810, %v821
    %v831 = vmul.f32 %v811, %v821
    %v832 = vmul.f32 %v812, %v821
    %v833 = vmul.f32 %v813, %v821
    %v834 = vmul.f32 %v814, %v821
    %v835 = vmul.f32 %v815, %v821
    %v836 = vmul.f32 %v816, %v821
    %v837 = vmul.f32 %v817, %v821
    %v838 = vmul.f32 %v818, %v821
    %v839 = vld [vmem:[%s4] sm:$0x1]
    %v841 = vperm.slane %v839, 0
    %v843 = vadd.f32 %v823, %v841
    %v844 = vadd.f32 %v824, %v841
    %v845 = vadd.f32 %v825, %v841
    %v846 = vadd.f32 %v826, %v841
    %v847 = vadd.f32 %v827, %v841
    %v848 = vadd.f32 %v828, %v841
    %v849 = vadd.f32 %v829, %v841
    %v850 = vadd.f32 %v830, %v841
    %v851 = vadd.f32 %v831, %v841
    %v852 = vadd.f32 %v832, %v841
    %v853 = vadd.f32 %v833, %v841
    %v854 = vadd.f32 %v834, %v841
    %v855 = vadd.f32 %v835, %v841
    %v856 = vadd.f32 %v836, %v841
    %v857 = vadd.f32 %v837, %v841
    %v858 = vadd.f32 %v838, %v841
    %v859 = vmul.f32 %v843, 0.2
    %v860 = vmul.f32 %v844, 0.2
    %v861 = vmul.f32 %v845, 0.2
    %v862 = vmul.f32 %v846, 0.2
    %v863 = vmul.f32 %v847, 0.2
    %v864 = vmul.f32 %v848, 0.2
    %v865 = vmul.f32 %v849, 0.2
    %v866 = vmul.f32 %v850, 0.2
    %v867 = vmul.f32 %v851, 0.2
    %v868 = vmul.f32 %v852, 0.2
    %v869 = vmul.f32 %v853, 0.2
    %v870 = vmul.f32 %v854, 0.2
    %v871 = vmul.f32 %v855, 0.2
    %v872 = vmul.f32 %v856, 0.2
    %v873 = vmul.f32 %v857, 0.2
    %v874 = vmul.f32 %v858, 0.2
    %v875 = vmax.f32 %v843, %v859
    %v876 = vmax.f32 %v844, %v860
    %v877 = vmax.f32 %v845, %v861
    %v878 = vmax.f32 %v846, %v862
    %v879 = vmax.f32 %v847, %v863
    %v880 = vmax.f32 %v848, %v864
    %v881 = vmax.f32 %v849, %v865
    %v882 = vmax.f32 %v850, %v866
    %v883 = vmax.f32 %v851, %v867
    %v884 = vmax.f32 %v852, %v868
    %v885 = vmax.f32 %v853, %v869
    %v886 = vmax.f32 %v854, %v870
    %v887 = vmax.f32 %v855, %v871
    %v888 = vmax.f32 %v856, %v872
    %v889 = vmax.f32 %v857, %v873
    %v890 = vmax.f32 %v858, %v874
    %891 = vst [vmem:[#allocation10] sm:$0xff] %v875
    %892 = vst [vmem:[#allocation10 + $0x8] sm:$0xff] %v876
    %893 = vst [vmem:[#allocation10 + $0x10] sm:$0xff] %v877
    %894 = vst [vmem:[#allocation10 + $0x18] sm:$0xff] %v878
    %895 = vst [vmem:[#allocation10 + $0x20] sm:$0xff] %v879
    %896 = vst [vmem:[#allocation10 + $0x28] sm:$0xff] %v880
    %897 = vst [vmem:[#allocation10 + $0x30] sm:$0xff] %v881
    %898 = vst [vmem:[#allocation10 + $0x38] sm:$0xff] %v882
    %899 = vst [vmem:[#allocation10 + $0x40] sm:$0xff] %v883
    %900 = vst [vmem:[#allocation10 + $0x48] sm:$0xff] %v884
    %901 = vst [vmem:[#allocation10 + $0x50] sm:$0xff] %v885
    %902 = vst [vmem:[#allocation10 + $0x58] sm:$0xff] %v886
    %903 = vst [vmem:[#allocation10 + $0x60] sm:$0xff] %v887
    %904 = vst [vmem:[#allocation10 + $0x68] sm:$0xff] %v888
    %905 = vst [vmem:[#allocation10 + $0x70] sm:$0xff] %v889
    %906 = vst [vmem:[#allocation10 + $0x78] sm:$0xff] %v890
    // Predicated region
    $region46: #{tpu_custom_call.1} parent=1 // pred_check
      _
    $region47: #{tpu_custom_call.1} parent=1 // pred_check_branch
      %908 = sbr.rel (0) target = $region49
    $region48: #{tpu_custom_call.1} parent=1 // pred_region
      %910 = vsyncadd [#allocation4], 0
      %s911 = sshll.u32 [#allocation10], 4
      %s912 = int_to_ptr.vmem [resolvable:$true] %s911
      %s913 = sshll.u32 %s7, 4
      %s914 = int_to_ptr.hbm [resolvable:$true] %s913
      %919 = dma.vmem_to_hbm [thread:$0]  %s912, 2048, %s914, [#allocation4], 128, 128, 8
    $region49: #{tpu_custom_call.1} parent=1 // pred_fallthru
      _
    // Predicated region
    $region50: #{tpu_custom_call.1} parent=1 // pred_check
      _
    $region51: #{tpu_custom_call.1} parent=1 // pred_check_branch
      %921 = sbr.rel (0) target = $region53
    $region52: #{tpu_custom_call.1} parent=1 // pred_region
      %923 = dma.done [#allocation4], 2048
    $region53: #{tpu_custom_call.1} parent=1 // pred_fallthru
      _
    %924 = vsyncpa [#allocation3], 1
    %925 = vsyncpa [#allocation6], 1
    %926 = vsyncpa [#allocation9], 1
    %927 = vsyncpa [#allocation4], 1

</llo_original>
